<compile_context>
chip_gen: v7x
topology: tpu7x:2x2x1
jax: 0.10.0
libtpu: 0.0.40
codegen_flags: <defaults>
</compile_context>

<pallas_src>
import functools

import jax
import jax.numpy as jnp
from jax import lax
from jax.experimental import pallas as pl
from jax.experimental.pallas import tpu as pltpu

_LANE = 128
_SUBLANE_F32 = 8
_SUBLANE_BF16 = 16


def _round_up(a, m):
    return ((a + m - 1) // m) * m


# --------------------------------------------------------------------------
# Kernels
# --------------------------------------------------------------------------
def _matmul_kernel(x_ref, wt_ref, o_ref):
    """One (tm, tn) f32 output tile, accumulated directly across the k axis."""
    @pl.when(pl.program_id(2) == 0)
    def _():
        o_ref[...] = jnp.zeros_like(o_ref)

    # x tile: (tm, tk), W^T tile: (tk, tn) -> plain MXU contraction, f32 acc.
    o_ref[...] += jnp.dot(
        x_ref[...], wt_ref[...], preferred_element_type=jnp.float32
    )


def _small_matmul_kernel(x_ref, wt_ref, o_ref):
    """Whole-array single-block matmul for tiny shapes (no padding needed)."""
    o_ref[...] = jnp.dot(
        x_ref[...], wt_ref[...], preferred_element_type=jnp.float32
    ).astype(o_ref.dtype)


# --------------------------------------------------------------------------
# Wrappers
# --------------------------------------------------------------------------
@functools.partial(jax.jit, static_argnames=("compute_dtype",))
def _small_forward(x, wt, *, compute_dtype):
    B, _ = x.shape
    N = wt.shape[1]
    # Full-array blocks bypass the (8,128) divisibility rule -> no padding.
    return pl.pallas_call(
        _small_matmul_kernel,
        out_shape=jax.ShapeDtypeStruct((B, N), jnp.float32),
    )(x.astype(compute_dtype), wt)


@functools.partial(
    jax.jit, static_argnames=("tm", "tn", "tk", "out_cols", "compute_dtype")
)
def _tiled_forward(x, wt_p, *, tm, tn, tk, out_cols, compute_dtype):
    B, K = x.shape
    Kp, Np = wt_p.shape
    Bp = _round_up(B, tm)

    x_p = x.astype(compute_dtype)
    if (Bp, Kp) != (B, K):
        x_p = jnp.pad(x_p, ((0, Bp - B), (0, Kp - K)))

    grid = (Bp // tm, Np // tn, Kp // tk)
    in_itemsize = jnp.dtype(compute_dtype).itemsize

    # Realistic HBM traffic: x is re-read once per output-column block,
    # W^T once per output-row block, the f32 output is written once.
    cost = pl.CostEstimate(
        flops=2 * Bp * Kp * Np,
        transcendentals=0,
        bytes_accessed=(Bp * Kp * grid[1] + Kp * Np * grid[0]) * in_itemsize
        + Bp * Np * 4,
    )

    # Double-buffered input tiles + double-buffered f32 output tile + headroom,
    # capped well below v7x's 64 MiB physical VMEM (v5e/v6e have 128 MiB).
    footprint = 2 * ((tm * tk + tk * tn) * in_itemsize + tm * tn * 4)
    vmem_limit = int(min(max(footprint + (8 << 20), 32 << 20), 48 << 20))

    y_p = pl.pallas_call(
        _matmul_kernel,
        out_shape=jax.ShapeDtypeStruct((Bp, Np), jnp.float32),
        grid_spec=pltpu.PrefetchScalarGridSpec(
            num_scalar_prefetch=0,
            grid=grid,
            in_specs=[
                pl.BlockSpec((tm, tk), lambda i, j, k: (i, k)),  # x tile
                # TODO(synk): on v5e, sweep pipeline_mode=pl.Buffered(3) here if
                # profiling shows exposed W^T DMA at large tk.
                pl.BlockSpec((tk, tn), lambda i, j, k: (k, j)),  # W^T tile
            ],
            out_specs=pl.BlockSpec((tm, tn), lambda i, j, k: (i, j)),
        ),
        compiler_params=pltpu.CompilerParams(
            dimension_semantics=("parallel", "parallel", "arbitrary"),
            vmem_limit_bytes=vmem_limit,
        ),
        cost_estimate=cost,
    )(x_p, wt_p)

    if (Bp, Np) != (B, out_cols):
        y_p = y_p[:B, :out_cols]
    return y_p


class BaseLayer:
    """Pallas/TPU equivalent of the PyTorch BaseLayer: forward(x) = x @ W^T."""

    _SMALL_N = 256  # fast-path thresholds
    _SMALL_B = 256
    _TM_CAP = 1024  # largest single row-block (keeps W^T streamed once)

    def __init__(self, n, init_val, key, *, use_bf16=False, tn=1024, tk=1024):
        self.n = n
        self.init_val = init_val
        # Mirrors:  self.init = init_val * torch.randn(n, n)
        self.weight = init_val * jax.random.normal(key, (n, n), dtype=jnp.float32)
        self.use_bf16 = use_bf16
        self._compute_dtype = jnp.bfloat16 if use_bf16 else jnp.float32

        # ---- prepare W^T once: transpose, pad, cast (cached, not per-call) ----
        lane_align = 256 if n >= 256 else _LANE  # 256-aligned tiles for v6e/v7x MXU
        self._tn = min(tn, _round_up(n, lane_align))
        self._tk = min(tk, _round_up(n, lane_align))
        self._Np = _round_up(n, self._tn)
        self._Kp = _round_up(n, self._tk)

        wt = self.weight.T  # (in, out) so the kernel does a plain x @ Wt
        if (self._Kp, self._Np) != (n, n):
            wt = jnp.pad(wt, ((0, self._Kp - n), (0, self._Np - n)))
        self._wt_padded = jax.block_until_ready(wt.astype(self._compute_dtype))

        self._wt_small = None
        if n <= self._SMALL_N:
            self._wt_small = jax.block_until_ready(
                self.weight.T.astype(self._compute_dtype)
            )

    def weight_matrix(self):
        return self.weight

    def __call__(self, x):
        return self.forward(x)

    def forward(self, x):
        B, N = x.shape
        assert N == self.n, f"expected {self.n} input features, got {N}"

        # Fast path: tiny shapes -> single full-array block, no pad / slice.
        if B <= self._SMALL_B and N <= self._SMALL_N:
            return _small_forward(
                x, self._wt_small, compute_dtype=self._compute_dtype
            )

        # Tiled path.
        sublane = _SUBLANE_BF16 if self.use_bf16 else _SUBLANE_F32
        Bq = _round_up(B, sublane)
        # Keep grid_i == 1 whenever the batch fits one row block so W^T is
        # read from HBM exactly once; otherwise fall back to 512-row tiles.
        tm = Bq if Bq <= self._TM_CAP else 512
        tn = self._tn
        # v7x megacore: guarantee >= 2 "parallel" (i, j) blocks to shard.
        if (
            _round_up(B, tm) // tm == 1
            and self._Np // tn == 1
            and self._Np % 256 == 0
        ):
            tn = self._Np // 2
        return _tiled_forward(
            x,
            self._wt_padded,
            tm=tm,
            tn=tn,
            tk=self._tk,
            out_cols=N,
            compute_dtype=self._compute_dtype,
        )


if __name__ == "__main__":
    key = jax.random.PRNGKey(0)
    k1, k2, k3, k4 = jax.random.split(key, 4)
    init_val = 0.02

    # --- Case 1: the module's nominal small configuration (fast path) -------
    n, batch = 32, 8
    layer = BaseLayer(n, init_val, k1)
    x = jax.random.normal(k2, (batch, n), dtype=jnp.float32)
    y = jax.block_until_ready(layer(x))
    y_ref = jnp.dot(x, layer.weight_matrix().T, precision=lax.Precision.HIGHEST)
    assert y.shape == (batch, n) and y.dtype == jnp.float32
    assert jnp.allclose(y, y_ref, atol=1e-5, rtol=1e-5)

    # --- Case 2: larger shape exercising the tiled/pipelined kernel (f32) ---
    n2, batch2 = 512, 256
    layer2 = BaseLayer(n2, init_val, k3)
    x2 = jax.random.normal(k4, (batch2, n2), dtype=jnp.float32)
    y2 = jax.block_until_ready(layer2(x2))
    y2_ref = jnp.dot(x2, layer2.weight_matrix().T, precision=lax.Precision.HIGHEST)
    assert y2.shape == (batch2, n2) and y2.dtype == jnp.float32
    assert jnp.allclose(y2, y2_ref, atol=1e-3, rtol=1e-3)

    # --- Case 3: same shape, bf16 inputs / f32 accumulate (MXU-native) ------
    layer3 = BaseLayer(n2, init_val, k3, use_bf16=True)  # same key -> same W
    y3 = jax.block_until_ready(layer3(x2))
    assert y3.shape == (batch2, n2) and y3.dtype == jnp.float32
    assert jnp.allclose(y3, y2_ref, atol=3e-2, rtol=3e-2)

    print("KERNEL_OK")
</pallas_src>

<mosaic_0001>
module attributes {stable_mosaic.version = 11 : i64} {
  func.func @_small_matmul_kernel(%arg0: memref<8x32xf32, #tpu.memory_space<vmem>>, %arg1: memref<32x32xf32, #tpu.memory_space<vmem>>, %arg2: memref<8x32xf32, #tpu.memory_space<vmem>>) attributes {dimension_semantics = [], scalar_prefetch = 0 : i64, scratch_operands = 0 : i64, tpu.core_type = #tpu.core_type<tc>} {
    %c0 = arith.constant 0 : index
    %c0_0 = arith.constant 0 : index
    %0 = vector.load %arg0[%c0, %c0_0] : memref<8x32xf32, #tpu.memory_space<vmem>>, vector<8x32xf32>
    %c0_1 = arith.constant 0 : index
    %c0_2 = arith.constant 0 : index
    %1 = vector.load %arg1[%c0_1, %c0_2] : memref<32x32xf32, #tpu.memory_space<vmem>>, vector<32x32xf32>
    %cst = arith.constant dense<0.000000e+00> : vector<8x32xf32>
    %2 = tpu.matmul %0, %1, %cst {dimension_numbers = #tpu.dot_dimension_numbers<[1], [0], [0], [1], [0, 0, 1, 1], [], []>} : vector<8x32xf32>, vector<32x32xf32>, vector<8x32xf32> -> vector<8x32xf32>
    %c0_3 = arith.constant 0 : index
    %c0_4 = arith.constant 0 : index
    %3 = vector.load %arg2[%c0_3, %c0_4] : memref<8x32xf32, #tpu.memory_space<vmem>>, vector<8x32xf32>
    tpu.vector_store %arg2[%c0_3, %c0_4], %2 {strides = array<i32>} : memref<8x32xf32, #tpu.memory_space<vmem>>, vector<8x32xf32>,
    return
  }
}

</mosaic_0001>

<llo_original>
// kernel: _small_forward.1
$region0: #{_small_forward.1}
  #allocation0 [shape = 'u32[]', space=smem, size = 0x4, offset = 0x4, fixed_abs, tag = 'smem constant byte address 0x4 - core index']
  #allocation1 [shape = 'u32[144,128]{1,0:T(1,128)}', space=vmem, size = 0x12000, scoped, tag = 'internal scratch']
  %s0 = inlined_call_operand.hbm [shape: f32[8,32], index: 0, kind: input, shape index: {}]
  %s1 = inlined_call_operand.hbm [shape: f32[32,32], index: 1, kind: input, shape index: {}]
  %s2 = inlined_call_operand.hbm [shape: f32[8,32], index: 2, kind: output, shape index: {}]
  %s3 = sld [smem:[#allocation0]]
  $region26: #{_small_forward.1} parent=0
    _
  %s5 = ssub.s32 1, %s3
  %s6 = scalar_select 0, %s5, %s3
  $region1: #{_small_forward.1} parent=0
    #allocation2 [shape = 'u8[4096]{0}', space=vmem, size = 0x1000, scoped, tag = 'input window, operand 0, single buffered']
    #allocation3 [shape = 's32[1]{0}', space=sflag, size = 0x4, scoped, tag = 'scoped memory for _small_forward.1']
    #allocation4 [shape = 's32[1]{0}', space=sflag, size = 0x4, scoped, tag = 'scoped memory for _small_forward.1']
    #allocation5 [shape = 'u8[16384]{0}', space=vmem, size = 0x4000, scoped, tag = 'input window, operand 1, single buffered']
    #allocation6 [shape = 's32[1]{0}', space=sflag, size = 0x4, scoped, tag = 'scoped memory for _small_forward.1']
    #allocation7 [shape = 'u8[4096]{0}', space=vmem, size = 0x1000, scoped, tag = 'output window, operand 0, single buffered']
    %7 = vsyncpa [#allocation3], 0
    %8 = vsyncpa [#allocation6], 0
    %9 = vsyncpa [#allocation4], 0
    // Predicated region
    $region2: #{_small_forward.1} parent=1 // pred_check
      _
    $region3: #{_small_forward.1} parent=1 // pred_check_branch
      %11 = sbr.rel (0) target = $region5
    $region4: #{_small_forward.1} parent=1 // pred_region
      %s13 = ssub.s32 128, 128
      %14 = vsyncadd [#allocation3], %s13
      %s16 = sshll.u32 [#allocation2], 4
      %s17 = int_to_ptr.vmem [resolvable:$true] %s16
      %19 = dma.hbm_to_vmem [thread:$0]  %s0, 128, %s17, [#allocation3]
    $region5: #{_small_forward.1} parent=1 // pred_fallthru
      _
    // Predicated region
    $region6: #{_small_forward.1} parent=1 // pred_check
      _
    $region7: #{_small_forward.1} parent=1 // pred_check_branch
      %21 = sbr.rel (0) target = $region9
    $region8: #{_small_forward.1} parent=1 // pred_region
      %s23 = ssub.s32 512, 512
      %24 = vsyncadd [#allocation6], %s23
      %s25 = sshll.u32 [#allocation5], 4
      %s26 = int_to_ptr.vmem [resolvable:$true] %s25
      %31 = dma.hbm_to_vmem [thread:$0]  %s1, 512, %s26, [#allocation6], 128, 128, 8
    $region9: #{_small_forward.1} parent=1 // pred_fallthru
      _
    // Predicated region
    $region10: #{_small_forward.1} parent=1 // pred_check
      _
    $region11: #{_small_forward.1} parent=1 // pred_check_branch
      %33 = sbr.rel (0) target = $region13
    $region12: #{_small_forward.1} parent=1 // pred_region
      %34 = dma.done [#allocation3], 128
    $region13: #{_small_forward.1} parent=1 // pred_fallthru
      _
    // Predicated region
    $region14: #{_small_forward.1} parent=1 // pred_check
      _
    $region15: #{_small_forward.1} parent=1 // pred_check_branch
      %36 = sbr.rel (0) target = $region17
    $region16: #{_small_forward.1} parent=1 // pred_region
      %37 = dma.done [#allocation6], 512
    $region17: #{_small_forward.1} parent=1 // pred_fallthru
      _
    %v38 = vld [vmem:[#allocation2] sm:$0xff]
    %v39 = vld [vmem:[#allocation5] sm:$0xff]
    %v40 = vld [vmem:[#allocation5 + $0x8] sm:$0xff]
    %v41 = vld [vmem:[#allocation5 + $0x10] sm:$0xff]
    %v42 = vld [vmem:[#allocation5 + $0x18] sm:$0xff]
    %vm43 = vcmask 261120
    %v45 = vsel %vm43, %v38, 0
    %47 = vmatprep.subr.mxu0 0.0
    %48 = vmatpush1.msra.mxu0 %v39
    %49 = vmatprep.subr.mxu0 0.0
    %50 = vmatpush1.msra.mxu0 %v40
    %51 = vmatprep.subr.mxu0 0.0
    %52 = vmatpush1.msra.mxu0 %v41
    %53 = vmatprep.subr.mxu0 0.0
    %54 = vmatpush1.msra.mxu0 %v42
    %55 = vmatprep.subr.mxu0 0.0
    %56 = vmatpush1.msra.mxu0 0.0
    %57 = vmatprep.subr.mxu0 0.0
    %58 = vmatpush1.msra.mxu0 0.0
    %59 = vmatprep.subr.mxu0 0.0
    %60 = vmatpush1.msra.mxu0 0.0
    %61 = vmatprep.subr.mxu0 0.0
    %62 = vmatpush1.msra.mxu0 0.0
    %63 = vmatprep.subr.mxu0 0.0
    %64 = vmatpush1.msra.mxu0 0.0
    %65 = vmatprep.subr.mxu0 0.0
    %66 = vmatpush1.msra.mxu0 0.0
    %67 = vmatprep.subr.mxu0 0.0
    %68 = vmatpush1.msra.mxu0 0.0
    %69 = vmatprep.subr.mxu0 0.0
    %70 = vmatpush1.msra.mxu0 0.0
    %71 = vmatprep.subr.mxu0 0.0
    %72 = vmatpush1.msra.mxu0 0.0
    %73 = vmatprep.subr.mxu0 0.0
    %74 = vmatpush1.msra.mxu0 0.0
    %75 = vmatprep.subr.mxu0 0.0
    %76 = vmatpush1.msra.mxu0 0.0
    %77 = vmatprep.subr.mxu0 0.0
    %78 = vmatpush1.msra.mxu0 0.0
    %79 = vmatprep.subr.mxu0 0.0
    %80 = vmatpush1.msra.mxu0 0.0
    %81 = vmatprep.subr.mxu0 0.0
    %82 = vmatpush1.msra.mxu0 0.0
    %83 = vmatprep.subr.mxu0 0.0
    %84 = vmatpush1.msra.mxu0 0.0
    %85 = vmatprep.subr.mxu0 0.0
    %86 = vmatpush1.msra.mxu0 0.0
    %87 = vmatprep.subr.mxu0 0.0
    %88 = vmatpush1.msra.mxu0 0.0
    %89 = vmatprep.subr.mxu0 0.0
    %90 = vmatpush1.msra.mxu0 0.0
    %91 = vmatprep.subr.mxu0 0.0
    %92 = vmatpush1.msra.mxu0 0.0
    %93 = vmatprep.subr.mxu0 0.0
    %94 = vmatpush1.msra.mxu0 0.0
    %95 = vmatprep.subr.mxu0 0.0
    %96 = vmatpush1.msra.mxu0 0.0
    %97 = vmatprep.subr.mxu0 0.0
    %98 = vmatpush1.msra.mxu0 0.0
    %99 = vmatprep.subr.mxu0 0.0
    %100 = vmatpush1.msra.mxu0 0.0
    %101 = vmatprep.subr.mxu0 0.0
    %102 = vmatpush1.msra.mxu0 0.0
    %103 = vmatprep.subr.mxu0 0.0
    %104 = vmatpush1.msra.mxu0 0.0
    %105 = vmatprep.subr.mxu0 0.0
    %106 = vmatpush1.msra.mxu0 0.0
    %107 = vmatprep.subr.mxu0 0.0
    %108 = vmatpush1.msra.mxu0 0.0
    %109 = vmatprep.subr.mxu0 0.0
    %110 = vmatpush1.msra.mxu0 0.0
    %111 = vmatprep.mubr.f32.mxu0 0.0
    %112 = vmatmul.mubr.f32.gmra.mrb[0].mxu0 %v45
    %v113 = vpop.f32.mrb[0].mxu0
    %v114 = vadd.f32 0.0, %v113
    %v115 = vpop.f32.mrb[0].mxu0
    %116 = vdwg.mxu0
    %117 = vst.msk [vmem:[#allocation7] sm:$0xff] %vm43, %v114
    // Predicated region
    $region18: #{_small_forward.1} parent=1 // pred_check
      _
    $region19: #{_small_forward.1} parent=1 // pred_check_branch
      %119 = sbr.rel (0) target = $region21
    $region20: #{_small_forward.1} parent=1 // pred_region
      %s121 = ssub.s32 128, 128
      %122 = vsyncadd [#allocation4], %s121
      %s124 = sshll.u32 [#allocation7], 4
      %s125 = int_to_ptr.vmem [resolvable:$true] %s124
      %127 = dma.vmem_to_hbm [thread:$0]  %s125, 128, %s2, [#allocation4]
    $region21: #{_small_forward.1} parent=1 // pred_fallthru
      _
    // Predicated region
    $region22: #{_small_forward.1} parent=1 // pred_check
      _
    $region23: #{_small_forward.1} parent=1 // pred_check_branch
      %129 = sbr.rel (0) target = $region25
    $region24: #{_small_forward.1} parent=1 // pred_region
      %130 = dma.done [#allocation4], 128
    $region25: #{_small_forward.1} parent=1 // pred_fallthru
      _
    %131 = vsyncpa [#allocation3], 1
    %132 = vsyncpa [#allocation6], 1
    %133 = vsyncpa [#allocation4], 1

</llo_original>
